<compile_context>
chip_gen: v6e
topology: v6e:2x2x1
jax: 0.10.0
libtpu: 0.0.40
codegen_flags: <defaults>
</compile_context>

<pallas_src>
import jax
import jax.numpy as jnp
from jax.experimental import pallas as pl
from jax.experimental.pallas import tpu as pltpu

BN_EPS = 1e-5
_VMEM_BUDGET_BYTES = 24 * 1024 * 1024   # per-step working set target (fits v7x scoped VMEM)
_VMEM_LIMIT_BYTES = 32 * 1024 * 1024    # explicit scoped-VMEM limit (v5e default is only 16 MiB)
_MAX_TILE = 32768


def _pad8(c):
    return max(8, ((c + 7) // 8) * 8)


def _pick_tile(hw, c_in, c_out, in_itemsize, out_itemsize):
    """Largest lane tile T (multiple of 128, or the full extent when it fits) whose
    double-buffered per-step footprint stays inside the VMEM budget.  Prefers a
    divisor of hw (no tail); otherwise caller must mask the tail tile."""
    bytes_per_lane = (2 * _pad8(c_in) * in_itemsize              # x block (double-buffered)
                      + 2 * _pad8(c_out) * max(out_itemsize, 4))  # out / f32 y block
    cap = _VMEM_BUDGET_BYTES // max(bytes_per_lane, 1)
    cap = (cap // 128) * 128
    cap = max(128, min(cap, _MAX_TILE))
    if hw <= cap:
        return hw                      # full extent: legal and within budget
    t = cap
    while t >= 128:
        if hw % t == 0:
            return t                   # multiple-of-128 divisor -> no tail masking
        t -= 128
    return cap                         # no divisor: cdiv grid + masked tail in pass 1


def feature_transform(x_nchw, conv_weight, gamma, beta):
    """x_nchw: [N, C_in, H, W], conv_weight: [C_out, C_in, 1, 1], gamma/beta: [C_out]."""
    N, C_in, H, W = x_nchw.shape
    C_out = conv_weight.shape[0]
    HW = H * W
    M = N * HW

    out_dtype = x_nchw.dtype
    T = _pick_tile(HW, C_in, C_out,
                   jnp.dtype(x_nchw.dtype).itemsize, jnp.dtype(out_dtype).itemsize)
    num_t = pl.cdiv(HW, T)
    needs_mask = (HW % T) != 0
    grid = (N, num_t)

    # Zero-copy reshapes (no transposes): spatial goes on the lane axis.
    x3 = x_nchw.reshape(N, C_in, HW)
    w = conv_weight.reshape(C_out, C_in)

    bytes_x = x3.size * jnp.dtype(x3.dtype).itemsize
    bytes_out = N * C_out * HW * jnp.dtype(out_dtype).itemsize

    # -------- pass 1: per-batch partial sum(y) / sum(y^2), megacore-shardable --------
    def stats_kernel(x_ref, w_ref, sum_ref, sq_ref):
        # x_ref: [1, C_in, T]; w_ref: [C_out, C_in]
        # sum_ref / sq_ref: [1, C_out, 1] per-batch partials, VMEM-resident across t.
        @pl.when(pl.program_id(1) == 0)
        def _init():
            sum_ref[...] = jnp.zeros_like(sum_ref)
            sq_ref[...] = jnp.zeros_like(sq_ref)

        x = x_ref[0]                                                     # [C_in, T]
        y = jnp.dot(w_ref[...], x, preferred_element_type=jnp.float32)  # [C_out, T]
        if needs_mask:
            rem = HW - pl.program_id(1) * T
            lane = jax.lax.broadcasted_iota(jnp.int32, y.shape, 1)
            y = jnp.where(lane < rem, y, 0.0)
        sum_ref[0] += jnp.sum(y, axis=1, keepdims=True)
        sq_ref[0] += jnp.sum(y * y, axis=1, keepdims=True)

    sum_part, sq_part = pl.pallas_call(
        stats_kernel,
        out_shape=(
            jax.ShapeDtypeStruct((N, C_out, 1), jnp.float32),
            jax.ShapeDtypeStruct((N, C_out, 1), jnp.float32),
        ),
        grid_spec=pltpu.PrefetchScalarGridSpec(
            num_scalar_prefetch=0,
            grid=grid,
            in_specs=[
                pl.BlockSpec((1, C_in, T), lambda n, t: (n, 0, t)),
                pl.BlockSpec((C_out, C_in), lambda n, t: (0, 0)),
            ],
            out_specs=[
                pl.BlockSpec((1, C_out, 1), lambda n, t: (n, 0, 0)),
                pl.BlockSpec((1, C_out, 1), lambda n, t: (n, 0, 0)),
            ],
        ),
        compiler_params=pltpu.CompilerParams(
            dimension_semantics=("parallel", "arbitrary"),
            vmem_limit_bytes=_VMEM_LIMIT_BYTES,
        ),
        cost_estimate=pl.CostEstimate(
            flops=2 * M * C_in * C_out,
            transcendentals=0,
            bytes_accessed=bytes_x,
        ),
    )(x3, w)

    # -------- epilogue: combine partials, fold BN into W_scaled / shift (f32) --------
    sum_y = jnp.sum(sum_part, axis=0)                               # [C_out, 1]
    sumsq_y = jnp.sum(sq_part, axis=0)                              # [C_out, 1]
    mean = sum_y / jnp.float32(M)
    var = jnp.maximum(sumsq_y / jnp.float32(M) - mean * mean, 0.0)  # biased variance
    inv_std = jax.lax.rsqrt(var + BN_EPS)
    scale = gamma.reshape(C_out, 1).astype(jnp.float32) * inv_std   # [C_out, 1]
    shift = beta.reshape(C_out, 1).astype(jnp.float32) - mean * scale
    w_scaled = w.astype(jnp.float32) * scale                        # [C_out, C_in]

    # -------- pass 2: out = relu(W_scaled @ x + shift), lane-dense stores --------
    def apply_kernel(x_ref, w_ref, shift_ref, o_ref):
        # x_ref: [1, C_in, T]; w_ref: [C_out, C_in]; shift_ref: [C_out, 1]
        x = x_ref[0]
        y = jnp.dot(w_ref[...], x, preferred_element_type=jnp.float32)  # [C_out, T]
        o_ref[0] = jnp.maximum(y + shift_ref[...], 0.0).astype(o_ref.dtype)

    out3 = pl.pallas_call(
        apply_kernel,
        out_shape=jax.ShapeDtypeStruct((N, C_out, HW), out_dtype),
        grid_spec=pltpu.PrefetchScalarGridSpec(
            num_scalar_prefetch=0,
            grid=grid,
            in_specs=[
                pl.BlockSpec((1, C_in, T), lambda n, t: (n, 0, t)),
                pl.BlockSpec((C_out, C_in), lambda n, t: (0, 0)),
                pl.BlockSpec((C_out, 1), lambda n, t: (0, 0)),
            ],
            out_specs=pl.BlockSpec((1, C_out, T), lambda n, t: (n, 0, t)),
        ),
        compiler_params=pltpu.CompilerParams(
            dimension_semantics=("parallel", "parallel"),
            vmem_limit_bytes=_VMEM_LIMIT_BYTES,
        ),
        cost_estimate=pl.CostEstimate(
            flops=2 * M * C_in * C_out,
            transcendentals=0,
            bytes_accessed=bytes_x + bytes_out,
        ),
    )(x3, w_scaled, shift)

    return out3.reshape(N, C_out, H, W)


def _reference(x_nchw, conv_weight, gamma, beta):
    """Pure-JAX reference mirroring PyTorch Conv2d(1x1,no bias)+BatchNorm2d(train)+ReLU."""
    w = conv_weight.reshape(conv_weight.shape[0], conv_weight.shape[1])  # [C_out, C_in]
    y = jnp.einsum("nchw,oc->nohw", x_nchw, w)
    mean = jnp.mean(y, axis=(0, 2, 3), keepdims=True)
    var = jnp.mean((y - mean) ** 2, axis=(0, 2, 3), keepdims=True)  # biased
    y = (y - mean) * jax.lax.rsqrt(var + BN_EPS)
    y = y * gamma.reshape(1, -1, 1, 1) + beta.reshape(1, -1, 1, 1)
    return jnp.maximum(y, 0.0)


if __name__ == "__main__":
    feature_channels = 4
    transform_channels = 8
    N, H, W = 2, 16, 16

    key = jax.random.PRNGKey(0)
    kx, kw = jax.random.split(key)

    x = jax.random.normal(kx, (N, feature_channels, H, W), dtype=jnp.float32)
    # Conv2d weight [C_out, C_in, 1, 1]; deterministic init (kaiming-ish scale).
    conv_weight = jax.random.normal(
        kw, (transform_channels, feature_channels, 1, 1), dtype=jnp.float32
    ) * (1.0 / jnp.sqrt(feature_channels))
    # BatchNorm2d default init: gamma=1, beta=0.
    gamma = jnp.ones((transform_channels,), dtype=jnp.float32)
    beta = jnp.zeros((transform_channels,), dtype=jnp.float32)

    out = feature_transform(x, conv_weight, gamma, beta)
    out = jax.block_until_ready(out)

    ref = _reference(x, conv_weight, gamma, beta)
    assert out.shape == (N, transform_channels, H, W)
    assert jnp.allclose(out, ref, atol=1e-4, rtol=1e-4)

    print("KERNEL_OK")
</pallas_src>

<mosaic_0001>
module attributes {stable_mosaic.version = 11 : i64} {
  func.func @stats_kernel(%arg0: i32, %arg1: i32, %arg2: memref<1x4x256xf32, #tpu.memory_space<vmem>>, %arg3: memref<8x4xf32, #tpu.memory_space<vmem>>, %arg4: memref<1x8x1xf32, #tpu.memory_space<vmem>>, %arg5: memref<1x8x1xf32, #tpu.memory_space<vmem>>) attributes {dimension_semantics = [#tpu.dimension_semantics<parallel>, #tpu.dimension_semantics<arbitrary>], iteration_bounds = array<i64: 2, 1>, scalar_prefetch = 0 : i64, scratch_operands = 0 : i64, tpu.core_type = #tpu.core_type<tc>, window_params = [{transform_indices = @transform_0, window_bounds = array<i64: 1, 4, 256>}, {pipeline_mode = #tpu.pipeline_mode<synchronous>, transform_indices = @transform_1, window_bounds = array<i64: 8, 4>}, {transform_indices = @transform_2, window_bounds = array<i64: 1, 8, 1>}, {transform_indices = @transform_3, window_bounds = array<i64: 1, 8, 1>}]} {
    %c0_i32 = arith.constant 0 : i32
    %0 = arith.cmpi eq, %arg1, %c0_i32 : i32
    %1 = arith.extui %0 : i1 to i32
    %c0_i32_0 = arith.constant 0 : i32
    %2 = arith.cmpi ne, %1, %c0_i32_0 : i32
    scf.if %2 {
      %cst_19 = arith.constant 0.000000e+00 : f32
      %24 = vector.broadcast %cst_19 : f32 to vector<1x8x1xf32>
      %c0_20 = arith.constant 0 : index
      %c0_21 = arith.constant 0 : index
      %c0_22 = arith.constant 0 : index
      %25 = vector.load %arg4[%c0_20, %c0_21, %c0_22] : memref<1x8x1xf32, #tpu.memory_space<vmem>>, vector<1x8x1xf32>
      tpu.vector_store %arg4[%c0_20, %c0_21, %c0_22], %24 {strides = array<i32>} : memref<1x8x1xf32, #tpu.memory_space<vmem>>, vector<1x8x1xf32>,
      %cst_23 = arith.constant 0.000000e+00 : f32
      %26 = vector.broadcast %cst_23 : f32 to vector<1x8x1xf32>
      %c0_24 = arith.constant 0 : index
      %c0_25 = arith.constant 0 : index
      %c0_26 = arith.constant 0 : index
      %27 = vector.load %arg5[%c0_24, %c0_25, %c0_26] : memref<1x8x1xf32, #tpu.memory_space<vmem>>, vector<1x8x1xf32>
      tpu.vector_store %arg5[%c0_24, %c0_25, %c0_26], %26 {strides = array<i32>} : memref<1x8x1xf32, #tpu.memory_space<vmem>>, vector<1x8x1xf32>,
    } else {
    }
    %c0 = arith.constant 0 : index
    %c0_1 = arith.constant 0 : index
    %c0_2 = arith.constant 0 : index
    %3 = vector.load %arg2[%c0, %c0_1, %c0_2] : memref<1x4x256xf32, #tpu.memory_space<vmem>>, vector<1x4x256xf32>
    %4 = vector.shape_cast %3 : vector<1x4x256xf32> to vector<4x256xf32>
    %c0_3 = arith.constant 0 : index
    %c0_4 = arith.constant 0 : index
    %5 = vector.load %arg3[%c0_3, %c0_4] : memref<8x4xf32, #tpu.memory_space<vmem>>, vector<8x4xf32>
    %cst = arith.constant dense<0.000000e+00> : vector<8x256xf32>
    %6 = tpu.matmul %5, %4, %cst {dimension_numbers = #tpu.dot_dimension_numbers<[1], [0], [0], [1], [0, 0, 1, 1], [], []>} : vector<8x4xf32>, vector<4x256xf32>, vector<8x256xf32> -> vector<8x256xf32>
    %c0_5 = arith.constant 0 : index
    %c0_6 = arith.constant 0 : index
    %c0_7 = arith.constant 0 : index
    %7 = vector.load %arg4[%c0_5, %c0_6, %c0_7] : memref<1x8x1xf32, #tpu.memory_space<vmem>>, vector<1x8x1xf32>
    %8 = vector.shape_cast %7 : vector<1x8x1xf32> to vector<8x1xf32>
    %cst_8 = arith.constant dense<0.000000e+00> : vector<8xf32>
    %9 = vector.multi_reduction <add>, %6, %cst_8 [1] : vector<8x256xf32> to vector<8xf32>
    %10 = vector.shape_cast %9 : vector<8xf32> to vector<8x1xf32>
    %11 = arith.addf %8, %10 : vector<8x1xf32>
    %c0_9 = arith.constant 0 : index
    %c0_10 = arith.constant 0 : index
    %c0_11 = arith.constant 0 : index
    %12 = vector.load %arg4[%c0_9, %c0_10, %c0_11] : memref<1x8x1xf32, #tpu.memory_space<vmem>>, vector<1x8x1xf32>
    %13 = vector.shape_cast %12 : vector<1x8x1xf32> to vector<8x1xf32>
    %14 = vector.shape_cast %11 : vector<8x1xf32> to vector<1x8x1xf32>
    tpu.vector_store %arg4[%c0_9, %c0_10, %c0_11], %14 {strides = array<i32>} : memref<1x8x1xf32, #tpu.memory_space<vmem>>, vector<1x8x1xf32>,
    %c0_12 = arith.constant 0 : index
    %c0_13 = arith.constant 0 : index
    %c0_14 = arith.constant 0 : index
    %15 = vector.load %arg5[%c0_12, %c0_13, %c0_14] : memref<1x8x1xf32, #tpu.memory_space<vmem>>, vector<1x8x1xf32>
    %16 = vector.shape_cast %15 : vector<1x8x1xf32> to vector<8x1xf32>
    %17 = arith.mulf %6, %6 : vector<8x256xf32>
    %cst_15 = arith.constant dense<0.000000e+00> : vector<8xf32>
    %18 = vector.multi_reduction <add>, %17, %cst_15 [1] : vector<8x256xf32> to vector<8xf32>
    %19 = vector.shape_cast %18 : vector<8xf32> to vector<8x1xf32>
    %20 = arith.addf %16, %19 : vector<8x1xf32>
    %c0_16 = arith.constant 0 : index
    %c0_17 = arith.constant 0 : index
    %c0_18 = arith.constant 0 : index
    %21 = vector.load %arg5[%c0_16, %c0_17, %c0_18] : memref<1x8x1xf32, #tpu.memory_space<vmem>>, vector<1x8x1xf32>
    %22 = vector.shape_cast %21 : vector<1x8x1xf32> to vector<8x1xf32>
    %23 = vector.shape_cast %20 : vector<8x1xf32> to vector<1x8x1xf32>
    tpu.vector_store %arg5[%c0_16, %c0_17, %c0_18], %23 {strides = array<i32>} : memref<1x8x1xf32, #tpu.memory_space<vmem>>, vector<1x8x1xf32>,
    return
  }
  func.func @transform_0(%arg0: i32, %arg1: i32) -> (i32, i32, i32) {
    %c0_i32 = arith.constant 0 : i32
    %c0_i32_0 = arith.constant 0 : i32
    return %arg0, %c0_i32, %arg1 : i32, i32, i32
  }
  func.func @transform_1(%arg0: i32, %arg1: i32) -> (i32, i32) {
    %c0_i32 = arith.constant 0 : i32
    %c0_i32_0 = arith.constant 0 : i32
    %c0_i32_1 = arith.constant 0 : i32
    return %c0_i32, %c0_i32_0 : i32, i32
  }
  func.func @transform_2(%arg0: i32, %arg1: i32) -> (i32, i32, i32) {
    %c0_i32 = arith.constant 0 : i32
    %c0_i32_0 = arith.constant 0 : i32
    %c0_i32_1 = arith.constant 0 : i32
    return %arg0, %c0_i32, %c0_i32_0 : i32, i32, i32
  }
  func.func @transform_3(%arg0: i32, %arg1: i32) -> (i32, i32, i32) {
    %c0_i32 = arith.constant 0 : i32
    %c0_i32_0 = arith.constant 0 : i32
    %c0_i32_1 = arith.constant 0 : i32
    return %arg0, %c0_i32, %c0_i32_0 : i32, i32, i32
  }
}

</mosaic_0001>

<llo_original>
// kernel: tpu_custom_call.1
$region0: #{tpu_custom_call.1}
  #allocation0 [shape = 'u32[]', space=smem, size = 0x4, offset = 0x4, fixed_abs, tag = 'smem constant byte address 0x4 - core index']
  #allocation1 [shape = 'u32[144,128]{1,0:T(1,128)}', space=vmem, size = 0x12000, scoped, tag = 'internal scratch']
  %s0 = inlined_call_operand.hbm [shape: f32[2,4,256], index: 0, kind: input, shape index: {}]
  %s1 = inlined_call_operand.vmem [shape: f32[8,4], index: 1, kind: input, shape index: {}]
  %s2 = inlined_call_operand.vmem [shape: f32[2,8,1], index: 2, kind: output, shape index: {0}]
  %s3 = inlined_call_operand.vmem [shape: f32[2,8,1], index: 3, kind: output, shape index: {1}]
  %4 = xla_tuple %s2, %s3
  %s5 = sld [smem:[#allocation0]]
  $region57: #{tpu_custom_call.1} parent=0
    _
  %s7 = ssub.s32 1, %s5
  %s8 = scalar_select 0, %s7, %s5
  $region1: #{tpu_custom_call.1} parent=0
    #allocation2 [shape = 'u8[8192]{0}', space=vmem, size = 0x2000, scoped, tag = 'input window, operand 0']
    #allocation3 [shape = 's32[2]{0}', space=sflag, size = 0x8, scoped, tag = 'scoped memory for tpu_custom_call.1']
    %9 = vsyncpa [#allocation3], 0
    %s10 = scalar_lea.sflag [#allocation3], 1
    %11 = vsyncpa %s10, 0
    loop: start=0, step=1, limit=4
    $region2: #{tpu_custom_call.1} parent=1 // loop_pre_header
      _
    $region3: #{tpu_custom_call.1} parent=1 // loop_header
      %s13 = sphi 0, %s17
      %p14 = scmp.ge.s32.totalorder %s13, 4
      %s20 = sphi 0, %s32
      %s21 = sphi 0, %s28
      %s22 = sphi 0, %s20
      %s23 = sphi 0, %s21
      %s24 = sphi 0, %s22
      %s25 = sphi 0, %s23
      %s37 = sphi 0, %s39
      %s40 = sphi 0, %s37
      %s41 = sphi 0, %s40
      %s57 = sphi 0, %s41
      %s61 = sphi 0, %s61
      %s63 = sphi 0, %s61
      %s64 = sphi 0, %s63
      %s78 = sphi 0, %s64
      %s84 = sphi 0, %s86
      %s87 = sphi 0, %s84
      %s88 = sphi 0, %s87
      %s104 = sphi 0, %s88
      %s110 = sphi 0, %s112
      %s113 = sphi 0, %s110
      %s114 = sphi 0, %s113
      %s130 = sphi 0, %s114
    $region4: #{tpu_custom_call.1} parent=1 // loop_header_branch
      %16 = sbr.rel (%p14) target = $region8
    $region5: #{tpu_custom_call.1} parent=1 // loop_body
      %s18 = ssub.s32 %s13, 1
      %s19 = ssub.s32 %s13, 2
      %s26 = sadd.s32 1, %s21
      %p27 = scmp.ge.s32.totalorder %s26, 1
      %s28 = scalar_select %p27, 0, %s26
      %s29 = sadd.s32 1, %s20
      %s30 = scalar_select %p27, %s29, %s20
      %p31 = scmp.ge.s32.totalorder %s30, 2
      %s32 = scalar_select %p31, 0, %s30
      %s33 = ssub.s32 %s20, %s32
      %s34 = ssub.s32 %s21, %s28
      %s35 = sor.u32 %s33, %s34
      %p36 = scmp.eq.s32.totalorder %s35, 0
      %s38 = sadd.s32 %s37, 1
      %s39 = scalar_select %p36, %s37, %s38
      %p42 = pneg %p36
      %p43 = scmp.eq.s32.totalorder %s13, 1
      %p44 = por %p42, %p43
      %p45 = scmp.ne.s32.totalorder %s37, %s40
      %p46 = scmp.eq.s32.totalorder %s13, 0
      %p47 = por %p45, %p46
      %p48 = scmp.ne.s32.totalorder %s37, %s40
      %p49 = scmp.eq.s32.totalorder %s18, 1
      %p50 = por %p48, %p49
      %p51 = scmp.ne.s32.totalorder %s40, %s41
      %p52 = scmp.eq.s32.totalorder %s18, 0
      %p53 = por %p51, %p52
      %p54 = scmp.ne.s32.totalorder %s40, %s41
      %p55 = scmp.eq.s32.totalorder %s19, 1
      %p56 = por %p54, %p55
      %p58 = scmp.ne.s32.totalorder %s41, %s57
      %p59 = scmp.eq.s32.totalorder %s19, 0
      %p60 = por %p58, %p59
      %s62 = sadd.s32 %s61, 1
      %p65 = scmp.eq.s32.totalorder %s13, 1
      %p66 = scmp.ne.s32.totalorder %s61, %s63
      %p67 = scmp.eq.s32.totalorder %s13, 0
      %p68 = por %p66, %p67
      %p69 = scmp.ne.s32.totalorder %s61, %s63
      %p70 = scmp.eq.s32.totalorder %s18, 1
      %p71 = por %p69, %p70
      %p72 = scmp.ne.s32.totalorder %s63, %s64
      %p73 = scmp.eq.s32.totalorder %s18, 0
      %p74 = por %p72, %p73
      %p75 = scmp.ne.s32.totalorder %s63, %s64
      %p76 = scmp.eq.s32.totalorder %s19, 1
      %p77 = por %p75, %p76
      %p79 = scmp.ne.s32.totalorder %s64, %s78
      %p80 = scmp.eq.s32.totalorder %s19, 0
      %p81 = por %p79, %p80
      %s82 = ssub.s32 %s20, %s32
      %p83 = scmp.eq.s32.totalorder %s82, 0
      %s85 = sadd.s32 %s84, 1
      %s86 = scalar_select %p83, %s84, %s85
      %p89 = pneg %p83
      %p90 = scmp.eq.s32.totalorder %s13, 1
      %p91 = por %p89, %p90
      %p92 = scmp.ne.s32.totalorder %s84, %s87
      %p93 = scmp.eq.s32.totalorder %s13, 0
      %p94 = por %p92, %p93
      %p95 = scmp.ne.s32.totalorder %s84, %s87
      %p96 = scmp.eq.s32.totalorder %s18, 1
      %p97 = por %p95, %p96
      %p98 = scmp.ne.s32.totalorder %s87, %s88
      %p99 = scmp.eq.s32.totalorder %s18, 0
      %p100 = por %p98, %p99
      %p101 = scmp.ne.s32.totalorder %s87, %s88
      %p102 = scmp.eq.s32.totalorder %s19, 1
      %p103 = por %p101, %p102
      %p105 = scmp.ne.s32.totalorder %s88, %s104
      %p106 = scmp.eq.s32.totalorder %s19, 0
      %p107 = por %p105, %p106
      %s108 = ssub.s32 %s20, %s32
      %p109 = scmp.eq.s32.totalorder %s108, 0
      %s111 = sadd.s32 %s110, 1
      %s112 = scalar_select %p109, %s110, %s111
      %p115 = pneg %p109
      %p116 = scmp.eq.s32.totalorder %s13, 1
      %p117 = por %p115, %p116
      %p118 = scmp.ne.s32.totalorder %s110, %s113
      %p119 = scmp.eq.s32.totalorder %s13, 0
      %p120 = por %p118, %p119
      %p121 = scmp.ne.s32.totalorder %s110, %s113
      %p122 = scmp.eq.s32.totalorder %s18, 1
      %p123 = por %p121, %p122
      %p124 = scmp.ne.s32.totalorder %s113, %s114
      %p125 = scmp.eq.s32.totalorder %s18, 0
      %p126 = por %p124, %p125
      %p127 = scmp.ne.s32.totalorder %s113, %s114
      %p128 = scmp.eq.s32.totalorder %s19, 1
      %p129 = por %p127, %p128
      %p131 = scmp.ne.s32.totalorder %s114, %s130
      %p132 = scmp.eq.s32.totalorder %s19, 0
      %p133 = por %p131, %p132
      %p134 = scmp.le.s32.totalorder 1, %s13
      %p135 = scmp.lt.s32.totalorder %s13, 3
      %p136 = pnand %p134, %p135
      %p137 = pneg %p136
      // Predicated region
      $region9: #{tpu_custom_call.1} parent=5 // pred_check
        _
      $region10: #{tpu_custom_call.1} parent=5 // pred_check_branch
        %139 = sbr.rel (%p136) target = $region12
      $region11: #{tpu_custom_call.1} parent=5 // pred_region
        %s140 = ssub.s32 %s13, 1
        // Predicated region
        $region13: #{tpu_custom_call.1} parent=11 // pred_check
          %p141 = pneg %p74
        $region14: #{tpu_custom_call.1} parent=11 // pred_check_branch
          %143 = sbr.rel (%p141) target = $region16
        $region15: #{tpu_custom_call.1} parent=11 // pred_region
          _
        $region16: #{tpu_custom_call.1} parent=11 // pred_fallthru
          _
      $region12: #{tpu_custom_call.1} parent=5 // pred_fallthru
        _
      %p144 = scmp.lt.s32.totalorder %s13, 2
      // Predicated region
      $region17: #{tpu_custom_call.1} parent=5 // pred_check
        %p145 = pneg %p144
      $region18: #{tpu_custom_call.1} parent=5 // pred_check_branch
        %147 = sbr.rel (%p145) target = $region20
      $region19: #{tpu_custom_call.1} parent=5 // pred_region
        // Predicated region
        $region21: #{tpu_custom_call.1} parent=19 // pred_check
          %p148 = pneg %p47
        $region22: #{tpu_custom_call.1} parent=19 // pred_check_branch
          %150 = sbr.rel (%p148) target = $region24
        $region23: #{tpu_custom_call.1} parent=19 // pred_region
          %s151 = sand.u32 %s37, 1
          %s152 = scalar_lea.sflag [#allocation3], %s151
          %s153 = sand.u32 %s37, 1
          %s154 = smul.addr %s153, 8
          %s155 = scalar_lea.vmem [#allocation2], %s154
          %s156 = smul.u32 2, %s21
          %s158 = ssub.s32 128, 128
          %159 = vsyncadd %s152, %s158
          %s160 = smul.addr %s20, 2
          %s161 = sadd.s32 %s156, %s160
          %s162 = smul.addr %s161, 64
          %s163 = scalar_lea.hbm %s0, %s162
          %s165 = sshll.u32 %s155, 4
          %s166 = int_to_ptr.vmem [resolvable:$true] %s165
          %168 = dma.hbm_to_vmem [thread:$0]  %s163, 128, %s166, %s152
        $region24: #{tpu_custom_call.1} parent=19 // pred_fallthru
          _
      $region20: #{tpu_custom_call.1} parent=5 // pred_fallthru
        _
      %p169 = scmp.le.s32.totalorder 1, %s13
      %p170 = scmp.lt.s32.totalorder %s13, 3
      %p171 = pnand %p169, %p170
      %p172 = pneg %p171
      // Predicated region
      $region25: #{tpu_custom_call.1} parent=5 // pred_check
        _
      $region26: #{tpu_custom_call.1} parent=5 // pred_check_branch
        %174 = sbr.rel (%p171) target = $region28
      $region27: #{tpu_custom_call.1} parent=5 // pred_region
        %s175 = ssub.s32 %s13, 1
        %s176 = sand.u32 %s40, 1
        %s177 = scalar_lea.sflag [#allocation3], %s176
        %s178 = sand.u32 %s40, 1
        %s179 = smul.addr %s178, 8
        %s180 = scalar_lea.vmem [#allocation2], %s179
        // Predicated region
        $region29: #{tpu_custom_call.1} parent=27 // pred_check
          %p181 = pneg %p53
        $region30: #{tpu_custom_call.1} parent=27 // pred_check_branch
          %183 = sbr.rel (%p181) target = $region32
        $region31: #{tpu_custom_call.1} parent=27 // pred_region
          %184 = dma.done %s177, 128
        $region32: #{tpu_custom_call.1} parent=27 // pred_fallthru
          _
        %s185 = sand.u32 %s40, 1
        %s186 = scalar_lea.sflag [#allocation3], %s185
        %s187 = sand.u32 %s40, 1
        %s188 = smul.addr %s187, 8
        %s189 = scalar_lea.vmem [#allocation2], %s188
        %p190 = pneg %p53
        %p191 = pneg %p50
        %p192 = pneg %p74
        %p193 = pneg %p71
        %p194 = pneg %p100
        %p195 = pneg %p97
        %p196 = scmp.lt.s32.totalorder %s22, 1
        %s197 = scalar_select %p196, %s22, 1
        %s198 = smul.addr %s197, 8
        %s199 = scalar_lea.vmem %s2, %s198
        %p200 = pneg %p126
        %p201 = pneg %p123
        %p202 = scmp.lt.s32.totalorder %s22, 1
        %s203 = scalar_select %p202, %s22, 1
        %s204 = smul.addr %s203, 8
        %s205 = scalar_lea.vmem %s3, %s204
        %s206 = smul.u32 2, %s23
        %p207 = scmp.lt.s32.totalorder %s22, 1
        %s208 = scalar_select %p207, %s22, 1
        %s209 = smul.addr %s208, 8
        %s210 = scalar_lea.vmem %s2, %s209
        %p211 = scmp.lt.s32.totalorder %s22, 1
        %s212 = scalar_select %p211, %s22, 1
        %s213 = smul.addr %s212, 8
        %s214 = scalar_lea.vmem %s3, %s213
        %p215 = scmp.eq.s32.totalorder %s23, 0
        // Predicated region
        $region33: #{tpu_custom_call.1} parent=27 // pred_check
          %p216 = pneg %p215
        $region34: #{tpu_custom_call.1} parent=27 // pred_check_branch
          %218 = sbr.rel (%p216) target = $region36
        $region35: #{tpu_custom_call.1} parent=27 // pred_region
          %vm219 = vcmask 7168
          %220 = vst.msk [vmem:[%s210] sm:$0xff] %vm219, 0.0
          %221 = vst.msk [vmem:[%s214] sm:$0xff] %vm219, 0.0
        $region36: #{tpu_custom_call.1} parent=27 // pred_fallthru
          _
        %v222 = vld [vmem:[%s180] sm:$0xff]
        %v223 = vld [vmem:[%s1] sm:$0xff]
        %v225 = vcombine.high %v222, %v222
        %vm226 = vcmask 31744
        %v228 = vsel %vm226, %v223, 0
        %vm230 = vcmask 1043456
        %v231 = vsel %vm230, %v222, 0
        %v233 = vsel %vm230, %v225, 0
        %235 = vmatprep.subr.mxu0 0.0
        %236 = vmatpush1.msra.mxu0 0.0
        %237 = vmatprep.subr.mxu0 0.0
        %238 = vmatpush1.msra.mxu0 0.0
        %239 = vmatprep.subr.mxu0 0.0
        %240 = vmatpush1.msra.mxu0 0.0
        %241 = vmatprep.subr.mxu0 0.0
        %242 = vmatpush1.msra.mxu0 0.0
        %243 = vmatprep.subr.mxu0 0.0
        %244 = vmatpush1.msra.mxu0 0.0
        %245 = vmatprep.subr.mxu0 0.0
        %246 = vmatpush1.msra.mxu0 0.0
        %247 = vmatprep.subr.mxu0 0.0
        %248 = vmatpush1.msra.mxu0 0.0
        %249 = vmatprep.subr.mxu0 0.0
        %250 = vmatpush1.msra.mxu0 0.0
        %251 = vmatprep.subr.mxu0 0.0
        %252 = vmatpush1.msra.mxu0 0.0
        %253 = vmatprep.subr.mxu0 0.0
        %254 = vmatpush1.msra.mxu0 0.0
        %255 = vmatprep.subr.mxu0 0.0
        %256 = vmatpush1.msra.mxu0 0.0
        %257 = vmatprep.subr.mxu0 0.0
        %258 = vmatpush1.msra.mxu0 0.0
        %259 = vmatprep.subr.mxu0 0.0
        %260 = vmatpush1.msra.mxu0 0.0
        %261 = vmatprep.subr.mxu0 0.0
        %262 = vmatpush1.msra.mxu0 0.0
        %263 = vmatprep.subr.mxu0 0.0
        %264 = vmatpush1.msra.mxu0 0.0
        %265 = vmatprep.subr.mxu0 %v233
        %266 = vmatpush1.msra.mxu0 %v231
        %267 = vmatprep.subr.mxu0 0.0
        %268 = vmatpush2.msra.mxu0 0.0
        %269 = vmatprep.subr.mxu0 0.0
        %270 = vmatpush2.msra.mxu0 0.0
        %271 = vmatprep.subr.mxu0 0.0
        %272 = vmatpush2.msra.mxu0 0.0
        %273 = vmatprep.subr.mxu0 0.0
        %274 = vmatpush2.msra.mxu0 0.0
        %275 = vmatprep.subr.mxu0 0.0
        %276 = vmatpush2.msra.mxu0 0.0
        %277 = vmatprep.subr.mxu0 0.0
        %278 = vmatpush2.msra.mxu0 0.0
        %279 = vmatprep.subr.mxu0 0.0
        %280 = vmatpush2.msra.mxu0 0.0
        %281 = vmatprep.subr.mxu0 0.0
        %282 = vmatpush2.msra.mxu0 0.0
        %283 = vmatprep.subr.mxu0 0.0
        %284 = vmatpush2.msra.mxu0 0.0
        %285 = vmatprep.subr.mxu0 0.0
        %286 = vmatpush2.msra.mxu0 0.0
        %287 = vmatprep.subr.mxu0 0.0
        %288 = vmatpush2.msra.mxu0 0.0
        %289 = vmatprep.subr.mxu0 0.0
        %290 = vmatpush2.msra.mxu0 0.0
        %291 = vmatprep.subr.mxu0 0.0
        %292 = vmatpush2.msra.mxu0 0.0
        %293 = vmatprep.subr.mxu0 0.0
        %294 = vmatpush2.msra.mxu0 0.0
        %295 = vmatprep.subr.mxu0 0.0
        %296 = vmatpush2.msra.mxu0 0.0
        %297 = vmatprep.subr.mxu0 0.0
        %298 = vmatpush2.msra.mxu0 0.0
        %299 = vmatprep.mubr.f32.mxu0 0.0
        %300 = vmatmul.mubr.f32.gmra.mxu0 %v228
        %v301 = vpop.f32.mrf.mxu0
        %v302 = vadd.f32 0.0, %v301
        %v303 = vpop.f32.mrf.mxu0
        %v304 = vadd.f32 0.0, %v303
        %305 = vdwg.mxu0
        %v306 = vld [vmem:[%s210] sm:$0xff]
        %v307 = vadd.f32 %v302, %v304
        %308 = vadd.xlane.f32.xlu0 %v307
        %v309 = vpop.xlane.xlu0 %308
        %v310 = vadd.f32 %v306, %v309
        %vm311 = vcmask 7168
        %312 = vst.msk [vmem:[%s210] sm:$0xff] %vm311, %v310
        %v313 = vld [vmem:[%s214] sm:$0xff]
        %v314 = vmul.f32 %v302, %v302
        %v315 = vmul.f32 %v304, %v304
        %v316 = vadd.f32 %v314, %v315
        %317 = vadd.xlane.f32.xlu0 %v316
        %v318 = vpop.xlane.xlu0 %317
        %v319 = vadd.f32 %v313, %v318
        %320 = vst.msk [vmem:[%s214] sm:$0xff] %vm311, %v319
        %p321 = scmp.lt.s32.totalorder %s22, 1
        %s322 = scalar_select %p321, %s22, 1
        %s323 = smul.addr %s322, 8
        %s324 = scalar_lea.vmem %s2, %s323
        %p325 = scmp.lt.s32.totalorder %s22, 1
        %s326 = scalar_select %p325, %s22, 1
        %s327 = smul.addr %s326, 8
        %s328 = scalar_lea.vmem %s3, %s327
        // Predicated region
        $region37: #{tpu_custom_call.1} parent=27 // pred_check
          %p329 = pneg %p97
        $region38: #{tpu_custom_call.1} parent=27 // pred_check_branch
          %331 = sbr.rel (%p329) target = $region40
        $region39: #{tpu_custom_call.1} parent=27 // pred_region
          _
        $region40: #{tpu_custom_call.1} parent=27 // pred_fallthru
          _
        // Predicated region
        $region41: #{tpu_custom_call.1} parent=27 // pred_check
          %p332 = pneg %p123
        $region42: #{tpu_custom_call.1} parent=27 // pred_check_branch
          %334 = sbr.rel (%p332) target = $region44
        $region43: #{tpu_custom_call.1} parent=27 // pred_region
          _
        $region44: #{tpu_custom_call.1} parent=27 // pred_fallthru
          _
      $region28: #{tpu_custom_call.1} parent=5 // pred_fallthru
        _
      %p335 = scmp.le.s32.totalorder 2, %s13
      // Predicated region
      $region45: #{tpu_custom_call.1} parent=5 // pred_check
        %p336 = pneg %p335
      $region46: #{tpu_custom_call.1} parent=5 // pred_check_branch
        %338 = sbr.rel (%p336) target = $region48
      $region47: #{tpu_custom_call.1} parent=5 // pred_region
        %s339 = ssub.s32 %s13, 2
        // Predicated region
        $region49: #{tpu_custom_call.1} parent=47 // pred_check
          %p340 = pneg %p103
        $region50: #{tpu_custom_call.1} parent=47 // pred_check_branch
          %342 = sbr.rel (%p340) target = $region52
        $region51: #{tpu_custom_call.1} parent=47 // pred_region
          %p343 = scmp.lt.s32.totalorder %s24, 1
          %s344 = scalar_select %p343, %s24, 1
          %s345 = smul.addr %s344, 8
          %s346 = scalar_lea.vmem %s2, %s345
        $region52: #{tpu_custom_call.1} parent=47 // pred_fallthru
          _
        // Predicated region
        $region53: #{tpu_custom_call.1} parent=47 // pred_check
          %p347 = pneg %p129
        $region54: #{tpu_custom_call.1} parent=47 // pred_check_branch
          %349 = sbr.rel (%p347) target = $region56
        $region55: #{tpu_custom_call.1} parent=47 // pred_region
          %p350 = scmp.lt.s32.totalorder %s24, 1
          %s351 = scalar_select %p350, %s24, 1
          %s352 = smul.addr %s351, 8
          %s353 = scalar_lea.vmem %s3, %s352
        $region56: #{tpu_custom_call.1} parent=47 // pred_fallthru
          _
      $region48: #{tpu_custom_call.1} parent=5 // pred_fallthru
        _
    $region6: #{tpu_custom_call.1} parent=1 // loop_footer
      %s17 = sadd.s32 1, %s13
    $region7: #{tpu_custom_call.1} parent=1 // loop_footer_branch
      %12 = sbr.rel target = $region3
    $region8: #{tpu_custom_call.1} parent=1 // loop_exit
      _
    %354 = vsyncpa [#allocation3], 1
    %s355 = scalar_lea.sflag [#allocation3], 1
    %356 = vsyncpa %s355, 1

</llo_original>
